<compile_context>
chip_gen: v7x
topology: tpu7x:2x2x1
jax: 0.10.0
libtpu: 0.0.40
codegen_flags: <defaults>
</compile_context>

<pallas_src>
import functools

import numpy as np
import jax
import jax.numpy as jnp
from jax.experimental import pallas as pl
from jax.experimental.pallas import tpu as pltpu

EPS = 1e-5
SOFTPLUS_BETA = 2.0
SOFTPLUS_THRESHOLD = 20.0  # PyTorch nn.Softplus default threshold


def cmal_kernel(x_ref, w1_ref, b1_ref, w2_ref, b2_ref, o_ref, *,
                out_features, mxu_dtype):
    # --- MLP: Linear(inF -> 2*inF) + ReLU + Linear(2*inF -> 4*outF), f32 accum ---
    x = x_ref[...]
    if mxu_dtype is not None:
        x = x.astype(mxu_dtype)          # in-kernel cast (VPU) -- no extra HBM pass
    h1 = jnp.dot(x, w1_ref[...], preferred_element_type=jnp.float32)
    h1 = jnp.maximum(h1 + b1_ref[...].astype(jnp.float32), 0.0)
    h2 = jnp.dot(h1.astype(w2_ref.dtype), w2_ref[...],
                 preferred_element_type=jnp.float32)
    h2 = h2 + b2_ref[...].astype(jnp.float32)

    # --- Per-chunk activations on the full lane-dense (tb, 4*out) slab. ---
    # Lane-index masks select the m/b/t/p chunks.  All three transcendental
    # activations share ONE slab-wide exp (softplus: exp(min(2b,20)); sigmoid:
    # exp(-t); softmax: exp(p - pmax)); log1p is the only other heavy EUP pass.
    lane = jax.lax.broadcasted_iota(jnp.int32, h2.shape, 1)
    is_m = lane < out_features
    is_b = (lane >= out_features) & (lane < 2 * out_features)
    is_t = (lane >= 2 * out_features) & (lane < 3 * out_features)
    is_p = lane >= 3 * out_features

    # Row-wise max over the p-chunk lanes only (stable softmax).
    pmax = jnp.max(jnp.where(is_p, h2, -jnp.inf), axis=-1, keepdims=True)

    bz = SOFTPLUS_BETA * h2
    arg = jnp.where(is_b, jnp.minimum(bz, SOFTPLUS_THRESHOLD),
          jnp.where(is_t, -h2,
          jnp.where(is_p, h2 - pmax, 0.0)))
    e = jnp.exp(arg)                                    # single shared EUP exp pass

    # Softplus(beta=2) with PyTorch threshold (exp arg already clamped above).
    sp = jnp.where(bz > SOFTPLUS_THRESHOLD, h2,
                   jnp.log1p(e) * (1.0 / SOFTPLUS_BETA)) + EPS
    # Sigmoid scaled into (eps, 1): sigmoid(t) = 1 / (1 + exp(-t)).
    sig = (1.0 - EPS) * pl.reciprocal(1.0 + e, approx=True) + EPS
    # Softmax over the p lanes, scaled into (eps, 1).  Exact divide only on the
    # (tb, 1) denominator vector (negligible cost, tight numerics).
    psum = jnp.sum(jnp.where(is_p, e, 0.0), axis=-1, keepdims=True)
    sm = (1.0 - EPS) * (e * (1.0 / psum)) + EPS

    result = jnp.where(is_m, h2, jnp.where(is_b, sp, jnp.where(is_t, sig, sm)))
    o_ref[...] = result.astype(o_ref.dtype)      # single unmasked lane-dense store


def cmal_forward_fused(x, w1, b1, w2, b2, out_features, *,
                       block_b=4096, mxu_dtype=None, out_dtype=None):
    """CMAL forward returning the fused (B, 4*out_features) slab [m | b | t | p].

    Prefer this entry point: it avoids a second XLA/HBM pass over the result.
      mxu_dtype: cast the MXU operands (x, w1, w2) to e.g. bfloat16 (valid on
        v5e/v6e/v7x; all post-matmul activation math stays float32).
      out_dtype: dtype of the output slab (e.g. bfloat16 to halve output-side HBM
        traffic); defaults to x.dtype.
    """
    B, in_f = x.shape
    hid = w1.shape[-1]
    out4 = w2.shape[-1]
    assert out4 == 4 * out_features
    out_dtype = x.dtype if out_dtype is None else np.dtype(out_dtype)

    if mxu_dtype is not None:
        w1 = w1.astype(mxu_dtype)        # weight casts amortize; x is cast in-kernel
        w2 = w2.astype(mxu_dtype)

    # Sublane packing for the streamed arrays (x in, slab out).
    sub_in = 16 if x.dtype == jnp.bfloat16 else 8
    sub_out = 16 if out_dtype == jnp.bfloat16 else 8
    sub = max(sub_in, sub_out)

    # Batch tile: as large as possible (amortize ~0.35us per grid step) while the
    # double-buffered streamed tiles stay well under v7x's scoped-VMEM default.
    vmem_budget = 20 << 20
    bytes_per_row = 2 * (in_f * x.dtype.itemsize + out4 * out_dtype.itemsize)
    tb_cap = max(sub, vmem_budget // bytes_per_row)
    if B <= sub:
        tb = B                                  # full-array block (allowed)
    else:
        tb = min(block_b, B, tb_cap)
        tb = max(sub, (tb // sub) * sub)        # round down to sublane multiple

    kernel = functools.partial(cmal_kernel, out_features=out_features,
                               mxu_dtype=mxu_dtype)
    # w1/b1/w2/b2 use constant index_maps so they stay VMEM-resident across the
    # batch grid; they are tiny here (<100 KiB).  If in_features grows large,
    # also single-buffer them (pipeline_mode=pl.Buffered(1)) to save VMEM on v7x.
    return pl.pallas_call(
        kernel,
        out_shape=jax.ShapeDtypeStruct((B, out4), out_dtype),
        grid=(pl.cdiv(B, tb),),        # ragged last tile handled by Pallas (no jnp.pad)
        in_specs=[
            pl.BlockSpec((tb, in_f), lambda i: (i, 0)),    # x: streamed per tile
            pl.BlockSpec((in_f, hid), lambda i: (0, 0)),   # w1: VMEM-resident
            pl.BlockSpec((1, hid), lambda i: (0, 0)),      # b1
            pl.BlockSpec((hid, out4), lambda i: (0, 0)),   # w2
            pl.BlockSpec((1, out4), lambda i: (0, 0)),     # b2
        ],
        out_specs=pl.BlockSpec((tb, out4), lambda i: (i, 0)),  # fused lane-dense slab
        compiler_params=pltpu.CompilerParams(
            dimension_semantics=("parallel",),             # megacore split on v7x
        ),
    )(x, w1, b1, w2, b2)


def cmal_forward(x, w1, b1, w2, b2, out_features, **kwargs):
    """PyTorch-signature-compatible wrapper: returns (m, b, t, p).

    Note: the split is an extra XLA pass over the result; consumers that can take
    the fused slab should call cmal_forward_fused directly.
    """
    h = cmal_forward_fused(x, w1, b1, w2, b2, out_features, **kwargs)
    m, b, t, p = jnp.split(h, 4, axis=-1)
    return m, b, t, p


def init_params(key, in_features, out_features, dtype=jnp.float32):
    """Deterministic init mimicking PyTorch Linear default (uniform +-1/sqrt(fan_in))."""
    k1, k2, k3, k4 = jax.random.split(key, 4)
    hid = in_features * 2
    out4 = out_features * 4
    lim1 = 1.0 / (in_features ** 0.5)
    lim2 = 1.0 / (hid ** 0.5)
    w1 = jax.random.uniform(k1, (in_features, hid), dtype, -lim1, lim1)
    b1 = jax.random.uniform(k2, (1, hid), dtype, -lim1, lim1)
    w2 = jax.random.uniform(k3, (hid, out4), dtype, -lim2, lim2)
    b2 = jax.random.uniform(k4, (1, out4), dtype, -lim2, lim2)
    return w1, b1, w2, b2


def cmal_reference(x, w1, b1, w2, b2):
    h1 = jnp.maximum(x @ w1 + b1, 0.0)
    h2 = h1 @ w2 + b2
    m, b, t, p = jnp.split(h2, 4, axis=-1)
    bz = SOFTPLUS_BETA * b
    sp = jnp.where(bz > SOFTPLUS_THRESHOLD, b, jnp.log1p(jnp.exp(bz)) / SOFTPLUS_BETA)
    b = sp + EPS
    t = (1.0 - EPS) * jax.nn.sigmoid(t) + EPS
    p = (1.0 - EPS) * jax.nn.softmax(p, axis=-1) + EPS
    return m, b, t, p


if __name__ == "__main__":
    in_features = 32
    out_features = 32
    batch = 8

    key = jax.random.PRNGKey(0)
    kx, kp = jax.random.split(key)
    x = jax.random.normal(kx, (batch, in_features), jnp.float32)
    w1, b1, w2, b2 = init_params(kp, in_features, out_features)

    rm, rb, rt, rp = cmal_reference(x, w1, b1, w2, b2)

    # f32 MXU-operand path.  Tolerance is moderate because (a) XLA's default f32 dot
    # on TPU and the in-kernel MXU dot may use different bf16-pass decompositions,
    # and (b) the sigmoid uses an approx EUP reciprocal (~2e-4 abs).
    m, b, t, p = cmal_forward(x, w1, b1, w2, b2, out_features)
    jax.block_until_ready((m, b, t, p))
    for a, r in ((m, rm), (b, rb), (t, rt), (p, rp)):
        assert jnp.allclose(a, r, atol=5e-3, rtol=5e-3), "mismatch vs reference (f32)"

    # bf16 MXU operands (fast path on v5e/v6e/v7x); activation math stays f32.
    m16, b16, t16, p16 = cmal_forward(x, w1, b1, w2, b2, out_features,
                                      mxu_dtype=jnp.bfloat16)
    jax.block_until_ready((m16, b16, t16, p16))
    for a, r in ((m16, rm), (b16, rb), (t16, rt), (p16, rp)):
        assert jnp.allclose(a, r, atol=5e-2, rtol=5e-2), "mismatch vs reference (bf16)"

    print("KERNEL_OK")
</pallas_src>

<mosaic_0001>
module attributes {stable_mosaic.version = 11 : i64} {
  func.func @cmal_kernel(%arg0: i32, %arg1: memref<8x32xf32, #tpu.memory_space<vmem>>, %arg2: memref<32x64xf32, #tpu.memory_space<vmem>>, %arg3: memref<1x64xf32, #tpu.memory_space<vmem>>, %arg4: memref<64x128xf32, #tpu.memory_space<vmem>>, %arg5: memref<1x128xf32, #tpu.memory_space<vmem>>, %arg6: memref<8x128xf32, #tpu.memory_space<vmem>>) attributes {dimension_semantics = [#tpu.dimension_semantics<parallel>], iteration_bounds = array<i64: 1>, scalar_prefetch = 0 : i64, scratch_operands = 0 : i64, tpu.core_type = #tpu.core_type<tc>, window_params = [{transform_indices = @transform_0, window_bounds = array<i64: 8, 32>}, {pipeline_mode = #tpu.pipeline_mode<synchronous>, transform_indices = @transform_1, window_bounds = array<i64: 32, 64>}, {pipeline_mode = #tpu.pipeline_mode<synchronous>, transform_indices = @transform_2, window_bounds = array<i64: 1, 64>}, {pipeline_mode = #tpu.pipeline_mode<synchronous>, transform_indices = @transform_3, window_bounds = array<i64: 64, 128>}, {pipeline_mode = #tpu.pipeline_mode<synchronous>, transform_indices = @transform_4, window_bounds = array<i64: 1, 128>}, {transform_indices = @transform_5, window_bounds = array<i64: 8, 128>}]} {
    %c0 = arith.constant 0 : index
    %c0_0 = arith.constant 0 : index
    %0 = vector.load %arg1[%c0, %c0_0] : memref<8x32xf32, #tpu.memory_space<vmem>>, vector<8x32xf32>
    %c0_1 = arith.constant 0 : index
    %c0_2 = arith.constant 0 : index
    %1 = vector.load %arg2[%c0_1, %c0_2] : memref<32x64xf32, #tpu.memory_space<vmem>>, vector<32x64xf32>
    %cst = arith.constant dense<0.000000e+00> : vector<8x64xf32>
    %2 = tpu.matmul %0, %1, %cst {dimension_numbers = #tpu.dot_dimension_numbers<[1], [0], [0], [1], [0, 0, 1, 1], [], []>} : vector<8x32xf32>, vector<32x64xf32>, vector<8x64xf32> -> vector<8x64xf32>
    %c0_3 = arith.constant 0 : index
    %c0_4 = arith.constant 0 : index
    %3 = vector.load %arg3[%c0_3, %c0_4] : memref<1x64xf32, #tpu.memory_space<vmem>>, vector<1x64xf32>
    %4 = vector.broadcast %3 : vector<1x64xf32> to vector<8x64xf32>
    %5 = arith.addf %2, %4 : vector<8x64xf32>
    %cst_5 = arith.constant 0.000000e+00 : f32
    %6 = vector.broadcast %cst_5 : f32 to vector<8x64xf32>
    %7 = arith.maximumf %5, %6 : vector<8x64xf32>
    %c0_6 = arith.constant 0 : index
    %c0_7 = arith.constant 0 : index
    %8 = vector.load %arg4[%c0_6, %c0_7] : memref<64x128xf32, #tpu.memory_space<vmem>>, vector<64x128xf32>
    %cst_8 = arith.constant dense<0.000000e+00> : vector<8x128xf32>
    %9 = tpu.matmul %7, %8, %cst_8 {dimension_numbers = #tpu.dot_dimension_numbers<[1], [0], [0], [1], [0, 0, 1, 1], [], []>} : vector<8x64xf32>, vector<64x128xf32>, vector<8x128xf32> -> vector<8x128xf32>
    %c0_9 = arith.constant 0 : index
    %c0_10 = arith.constant 0 : index
    %10 = vector.load %arg5[%c0_9, %c0_10] : memref<1x128xf32, #tpu.memory_space<vmem>>, vector<1x128xf32>
    %11 = vector.broadcast %10 : vector<1x128xf32> to vector<8x128xf32>
    %12 = arith.addf %9, %11 : vector<8x128xf32>
    %13 = tpu.iota {dimensions = array<i32: 1>} : vector<8x128xi32>
    %c32_i32 = arith.constant 32 : i32
    %14 = vector.broadcast %c32_i32 : i32 to vector<8x128xi32>
    %15 = arith.cmpi slt, %13, %14 : vector<8x128xi32>
    %c32_i32_11 = arith.constant 32 : i32
    %16 = vector.broadcast %c32_i32_11 : i32 to vector<8x128xi32>
    %17 = arith.cmpi sge, %13, %16 : vector<8x128xi32>
    %c64_i32 = arith.constant 64 : i32
    %18 = vector.broadcast %c64_i32 : i32 to vector<8x128xi32>
    %19 = arith.cmpi slt, %13, %18 : vector<8x128xi32>
    %20 = arith.andi %17, %19 : vector<8x128xi1>
    %c64_i32_12 = arith.constant 64 : i32
    %21 = vector.broadcast %c64_i32_12 : i32 to vector<8x128xi32>
    %22 = arith.cmpi sge, %13, %21 : vector<8x128xi32>
    %c96_i32 = arith.constant 96 : i32
    %23 = vector.broadcast %c96_i32 : i32 to vector<8x128xi32>
    %24 = arith.cmpi slt, %13, %23 : vector<8x128xi32>
    %25 = arith.andi %22, %24 : vector<8x128xi1>
    %c96_i32_13 = arith.constant 96 : i32
    %26 = vector.broadcast %c96_i32_13 : i32 to vector<8x128xi32>
    %27 = arith.cmpi sge, %13, %26 : vector<8x128xi32>
    %cst_14 = arith.constant 0xFF800000 : f32
    %28 = vector.broadcast %cst_14 : f32 to vector<8x128xf32>
    %29 = arith.select %27, %12, %28 : vector<8x128xi1>, vector<8x128xf32>
    %cst_15 = arith.constant dense<0xFF800000> : vector<8xf32>
    %30 = vector.multi_reduction <maximumf>, %29, %cst_15 [1] : vector<8x128xf32> to vector<8xf32>
    %31 = vector.shape_cast %30 : vector<8xf32> to vector<8x1xf32>
    %cst_16 = arith.constant 2.000000e+00 : f32
    %32 = vector.broadcast %cst_16 : f32 to vector<8x128xf32>
    %33 = arith.mulf %32, %12 : vector<8x128xf32>
    %cst_17 = arith.constant 2.000000e+01 : f32
    %34 = vector.broadcast %cst_17 : f32 to vector<8x128xf32>
    %35 = arith.minimumf %33, %34 : vector<8x128xf32>
    %cst_18 = arith.constant 0.000000e+00 : f32
    %36 = vector.broadcast %cst_18 : f32 to vector<8x128xf32>
    %37 = arith.subf %36, %12 : vector<8x128xf32>
    %38 = vector.broadcast %31 : vector<8x1xf32> to vector<8x128xf32>
    %39 = arith.subf %12, %38 : vector<8x128xf32>
    %cst_19 = arith.constant 0.000000e+00 : f32
    %40 = vector.broadcast %cst_19 : f32 to vector<8x128xf32>
    %41 = arith.select %27, %39, %40 : vector<8x128xi1>, vector<8x128xf32>
    %42 = arith.select %25, %37, %41 : vector<8x128xi1>, vector<8x128xf32>
    %43 = arith.select %20, %35, %42 : vector<8x128xi1>, vector<8x128xf32>
    %44 = math.exp %43 : vector<8x128xf32>
    %cst_20 = arith.constant 2.000000e+01 : f32
    %45 = vector.broadcast %cst_20 : f32 to vector<8x128xf32>
    %46 = arith.cmpf ogt, %33, %45 : vector<8x128xf32>
    %47 = math.log1p %44 : vector<8x128xf32>
    %cst_21 = arith.constant 5.000000e-01 : f32
    %48 = vector.broadcast %cst_21 : f32 to vector<8x128xf32>
    %49 = arith.mulf %47, %48 : vector<8x128xf32>
    %50 = arith.select %46, %12, %49 : vector<8x128xi1>, vector<8x128xf32>
    %cst_22 = arith.constant 9.99999974E-6 : f32
    %51 = vector.broadcast %cst_22 : f32 to vector<8x128xf32>
    %52 = arith.addf %50, %51 : vector<8x128xf32>
    %cst_23 = arith.constant 1.000000e+00 : f32
    %53 = vector.broadcast %cst_23 : f32 to vector<8x128xf32>
    %54 = arith.addf %53, %44 : vector<8x128xf32>
    %55 = tpu.reciprocal %54 {approx = true} : vector<8x128xf32> -> vector<8x128xf32>
    %cst_24 = arith.constant 0.999989986 : f32
    %56 = vector.broadcast %cst_24 : f32 to vector<8x128xf32>
    %57 = arith.mulf %56, %55 : vector<8x128xf32>
    %cst_25 = arith.constant 9.99999974E-6 : f32
    %58 = vector.broadcast %cst_25 : f32 to vector<8x128xf32>
    %59 = arith.addf %57, %58 : vector<8x128xf32>
    %cst_26 = arith.constant 0.000000e+00 : f32
    %60 = vector.broadcast %cst_26 : f32 to vector<8x128xf32>
    %61 = arith.select %27, %44, %60 : vector<8x128xi1>, vector<8x128xf32>
    %cst_27 = arith.constant dense<0.000000e+00> : vector<8xf32>
    %62 = vector.multi_reduction <add>, %61, %cst_27 [1] : vector<8x128xf32> to vector<8xf32>
    %63 = vector.shape_cast %62 : vector<8xf32> to vector<8x1xf32>
    %cst_28 = arith.constant 1.000000e+00 : f32
    %64 = vector.broadcast %cst_28 : f32 to vector<8x1xf32>
    %65 = arith.divf %64, %63 : vector<8x1xf32>
    %66 = vector.broadcast %65 : vector<8x1xf32> to vector<8x128xf32>
    %67 = arith.mulf %44, %66 : vector<8x128xf32>
    %cst_29 = arith.constant 0.999989986 : f32
    %68 = vector.broadcast %cst_29 : f32 to vector<8x128xf32>
    %69 = arith.mulf %68, %67 : vector<8x128xf32>
    %cst_30 = arith.constant 9.99999974E-6 : f32
    %70 = vector.broadcast %cst_30 : f32 to vector<8x128xf32>
    %71 = arith.addf %69, %70 : vector<8x128xf32>
    %72 = arith.select %25, %59, %71 : vector<8x128xi1>, vector<8x128xf32>
    %73 = arith.select %20, %52, %72 : vector<8x128xi1>, vector<8x128xf32>
    %74 = arith.select %15, %12, %73 : vector<8x128xi1>, vector<8x128xf32>
    %c0_31 = arith.constant 0 : index
    %c0_32 = arith.constant 0 : index
    %75 = vector.load %arg6[%c0_31, %c0_32] : memref<8x128xf32, #tpu.memory_space<vmem>>, vector<8x128xf32>
    tpu.vector_store %arg6[%c0_31, %c0_32], %74 {strides = array<i32>} : memref<8x128xf32, #tpu.memory_space<vmem>>, vector<8x128xf32>,
    return
  }
  func.func @transform_0(%arg0: i32) -> (i32, i32) {
    %c0_i32 = arith.constant 0 : i32
    %c0_i32_0 = arith.constant 0 : i32
    return %arg0, %c0_i32 : i32, i32
  }
  func.func @transform_1(%arg0: i32) -> (i32, i32) {
    %c0_i32 = arith.constant 0 : i32
    %c0_i32_0 = arith.constant 0 : i32
    %c0_i32_1 = arith.constant 0 : i32
    return %c0_i32, %c0_i32_0 : i32, i32
  }
  func.func @transform_2(%arg0: i32) -> (i32, i32) {
    %c0_i32 = arith.constant 0 : i32
    %c0_i32_0 = arith.constant 0 : i32
    %c0_i32_1 = arith.constant 0 : i32
    return %c0_i32, %c0_i32_0 : i32, i32
  }
  func.func @transform_3(%arg0: i32) -> (i32, i32) {
    %c0_i32 = arith.constant 0 : i32
    %c0_i32_0 = arith.constant 0 : i32
    %c0_i32_1 = arith.constant 0 : i32
    return %c0_i32, %c0_i32_0 : i32, i32
  }
  func.func @transform_4(%arg0: i32) -> (i32, i32) {
    %c0_i32 = arith.constant 0 : i32
    %c0_i32_0 = arith.constant 0 : i32
    %c0_i32_1 = arith.constant 0 : i32
    return %c0_i32, %c0_i32_0 : i32, i32
  }
  func.func @transform_5(%arg0: i32) -> (i32, i32) {
    %c0_i32 = arith.constant 0 : i32
    %c0_i32_0 = arith.constant 0 : i32
    return %arg0, %c0_i32 : i32, i32
  }
}

</mosaic_0001>

<llo_original>
// kernel: tpu_custom_call.1
$region0: #{tpu_custom_call.1}
  #allocation0 [shape = 'u32[]', space=smem, size = 0x4, offset = 0x4, fixed_abs, tag = 'smem constant byte address 0x4 - core index']
  #allocation1 [shape = 'u32[144,128]{1,0:T(1,128)}', space=vmem, size = 0x12000, scoped, tag = 'internal scratch']
  %s0 = inlined_call_operand.hbm [shape: f32[8,32], index: 0, kind: input, shape index: {}]
  %s1 = inlined_call_operand.hbm [shape: f32[32,64], index: 1, kind: input, shape index: {}]
  %s2 = inlined_call_operand.vmem [shape: f32[1,64], index: 2, kind: input, shape index: {}]
  %s3 = inlined_call_operand.hbm [shape: f32[64,128], index: 3, kind: input, shape index: {}]
  %s4 = inlined_call_operand.vmem [shape: f32[1,128], index: 4, kind: input, shape index: {}]
  %s5 = inlined_call_operand.hbm [shape: f32[8,128], index: 5, kind: output, shape index: {}]
  %s6 = sld [smem:[#allocation0]]
  $region42: #{tpu_custom_call.1} parent=0
    _
  %s8 = ssub.s32 1, %s6
  %s9 = scalar_select 0, %s8, %s6
  $region1: #{tpu_custom_call.1} parent=0
    #allocation2 [shape = 'u8[4096]{0}', space=vmem, size = 0x1000, scoped, tag = 'input window, operand 0, single buffered']
    #allocation3 [shape = 's32[1]{0}', space=sflag, size = 0x4, scoped, tag = 'scoped memory for tpu_custom_call.1']
    #allocation4 [shape = 's32[1]{0}', space=sflag, size = 0x4, scoped, tag = 'scoped memory for tpu_custom_call.1']
    #allocation5 [shape = 'u8[16384]{0}', space=vmem, size = 0x4000, scoped, tag = 'input window, operand 1, single buffered']
    #allocation6 [shape = 's32[1]{0}', space=sflag, size = 0x4, scoped, tag = 'scoped memory for tpu_custom_call.1']
    #allocation7 [shape = 'u8[32768]{0}', space=vmem, size = 0x8000, scoped, tag = 'input window, operand 3, single buffered']
    #allocation8 [shape = 'u8[4096]{0}', space=vmem, size = 0x1000, scoped, tag = 'output window, operand 0, single buffered']
    %10 = vsyncpa [#allocation3], 0
    %11 = vsyncpa [#allocation6], 0
    %12 = vsyncpa [#allocation4], 0
    // Predicated region
    $region2: #{tpu_custom_call.1} parent=1 // pred_check
      _
    $region3: #{tpu_custom_call.1} parent=1 // pred_check_branch
      %14 = sbr.rel (0) target = $region5
    $region4: #{tpu_custom_call.1} parent=1 // pred_region
      %s16 = ssub.s32 128, 128
      %17 = vsyncadd [#allocation3], %s16
      %s19 = sshll.u32 [#allocation2], 4
      %s20 = int_to_ptr.vmem [resolvable:$true] %s19
      %22 = dma.hbm_to_vmem [thread:$0]  %s0, 128, %s20, [#allocation3]
    $region5: #{tpu_custom_call.1} parent=1 // pred_fallthru
      _
    // Predicated region
    $region6: #{tpu_custom_call.1} parent=1 // pred_check
      _
    $region7: #{tpu_custom_call.1} parent=1 // pred_check_branch
      %24 = sbr.rel (0) target = $region9
    $region8: #{tpu_custom_call.1} parent=1 // pred_region
      %s26 = ssub.s32 512, 512
      %27 = vsyncadd [#allocation6], %s26
      %s28 = sshll.u32 [#allocation5], 4
      %s29 = int_to_ptr.vmem [resolvable:$true] %s28
      %34 = dma.hbm_to_vmem [thread:$0]  %s1, 512, %s29, [#allocation6], 128, 128, 8
    $region9: #{tpu_custom_call.1} parent=1 // pred_fallthru
      _
    // Predicated region
    $region10: #{tpu_custom_call.1} parent=1 // pred_check
      _
    $region11: #{tpu_custom_call.1} parent=1 // pred_check_branch
      %36 = sbr.rel (0) target = $region13
    $region12: #{tpu_custom_call.1} parent=1 // pred_region
      _
    $region13: #{tpu_custom_call.1} parent=1 // pred_fallthru
      _
    // Predicated region
    $region14: #{tpu_custom_call.1} parent=1 // pred_check
      _
    $region15: #{tpu_custom_call.1} parent=1 // pred_check_branch
      %38 = sbr.rel (0) target = $region17
    $region16: #{tpu_custom_call.1} parent=1 // pred_region
      %s40 = ssub.s32 1024, 1024
      %41 = vsyncadd [#allocation6], %s40
      %s42 = sshll.u32 [#allocation7], 4
      %s43 = int_to_ptr.vmem [resolvable:$true] %s42
      %48 = dma.hbm_to_vmem [thread:$0]  %s3, 1024, %s43, [#allocation6], 128, 128, 8
    $region17: #{tpu_custom_call.1} parent=1 // pred_fallthru
      _
    // Predicated region
    $region18: #{tpu_custom_call.1} parent=1 // pred_check
      _
    $region19: #{tpu_custom_call.1} parent=1 // pred_check_branch
      %50 = sbr.rel (0) target = $region21
    $region20: #{tpu_custom_call.1} parent=1 // pred_region
      _
    $region21: #{tpu_custom_call.1} parent=1 // pred_fallthru
      _
    // Predicated region
    $region22: #{tpu_custom_call.1} parent=1 // pred_check
      _
    $region23: #{tpu_custom_call.1} parent=1 // pred_check_branch
      %52 = sbr.rel (0) target = $region25
    $region24: #{tpu_custom_call.1} parent=1 // pred_region
      %53 = dma.done [#allocation3], 128
    $region25: #{tpu_custom_call.1} parent=1 // pred_fallthru
      _
    // Predicated region
    $region26: #{tpu_custom_call.1} parent=1 // pred_check
      _
    $region27: #{tpu_custom_call.1} parent=1 // pred_check_branch
      %55 = sbr.rel (0) target = $region29
    $region28: #{tpu_custom_call.1} parent=1 // pred_region
      %56 = dma.done [#allocation6], 512
    $region29: #{tpu_custom_call.1} parent=1 // pred_fallthru
      _
    // Predicated region
    $region30: #{tpu_custom_call.1} parent=1 // pred_check
      _
    $region31: #{tpu_custom_call.1} parent=1 // pred_check_branch
      %58 = sbr.rel (0) target = $region33
    $region32: #{tpu_custom_call.1} parent=1 // pred_region
      %59 = dma.done [#allocation6], 1024
    $region33: #{tpu_custom_call.1} parent=1 // pred_fallthru
      _
    %v60 = vld [vmem:[#allocation2] sm:$0xff]
    %v61 = vld [vmem:[#allocation5] sm:$0xff]
    %v62 = vld [vmem:[#allocation5 + $0x8] sm:$0xff]
    %v63 = vld [vmem:[#allocation5 + $0x10] sm:$0xff]
    %v64 = vld [vmem:[#allocation5 + $0x18] sm:$0xff]
    %v65 = vld [vmem:[%s2] sm:$0x1]
    %v67 = vlaneseq
    %v68 = vshrl.u32 %v67, 7
    %v69 = vsub.s32 0, %v68
    %v70 = vrot.slane %v65, %v69
    %vm72 = vcmask 261120
    %v74 = vsel %vm72, %v60, 0
    %76 = vmatprep.subr.mxu0 0.0
    %77 = vmatpush1.msra.mxu0 %v61
    %78 = vmatprep.subr.mxu0 0.0
    %79 = vmatpush1.msra.mxu0 %v62
    %80 = vmatprep.subr.mxu0 0.0
    %81 = vmatpush1.msra.mxu0 %v63
    %82 = vmatprep.subr.mxu0 0.0
    %83 = vmatpush1.msra.mxu0 %v64
    %84 = vmatprep.subr.mxu0 0.0
    %85 = vmatpush1.msra.mxu0 0.0
    %86 = vmatprep.subr.mxu0 0.0
    %87 = vmatpush1.msra.mxu0 0.0
    %88 = vmatprep.subr.mxu0 0.0
    %89 = vmatpush1.msra.mxu0 0.0
    %90 = vmatprep.subr.mxu0 0.0
    %91 = vmatpush1.msra.mxu0 0.0
    %92 = vmatprep.subr.mxu0 0.0
    %93 = vmatpush1.msra.mxu0 0.0
    %94 = vmatprep.subr.mxu0 0.0
    %95 = vmatpush1.msra.mxu0 0.0
    %96 = vmatprep.subr.mxu0 0.0
    %97 = vmatpush1.msra.mxu0 0.0
    %98 = vmatprep.subr.mxu0 0.0
    %99 = vmatpush1.msra.mxu0 0.0
    %100 = vmatprep.subr.mxu0 0.0
    %101 = vmatpush1.msra.mxu0 0.0
    %102 = vmatprep.subr.mxu0 0.0
    %103 = vmatpush1.msra.mxu0 0.0
    %104 = vmatprep.subr.mxu0 0.0
    %105 = vmatpush1.msra.mxu0 0.0
    %106 = vmatprep.subr.mxu0 0.0
    %107 = vmatpush1.msra.mxu0 0.0
    %108 = vmatprep.subr.mxu0 0.0
    %109 = vmatpush1.msra.mxu0 0.0
    %110 = vmatprep.subr.mxu0 0.0
    %111 = vmatpush1.msra.mxu0 0.0
    %112 = vmatprep.subr.mxu0 0.0
    %113 = vmatpush1.msra.mxu0 0.0
    %114 = vmatprep.subr.mxu0 0.0
    %115 = vmatpush1.msra.mxu0 0.0
    %116 = vmatprep.subr.mxu0 0.0
    %117 = vmatpush1.msra.mxu0 0.0
    %118 = vmatprep.subr.mxu0 0.0
    %119 = vmatpush1.msra.mxu0 0.0
    %120 = vmatprep.subr.mxu0 0.0
    %121 = vmatpush1.msra.mxu0 0.0
    %122 = vmatprep.subr.mxu0 0.0
    %123 = vmatpush1.msra.mxu0 0.0
    %124 = vmatprep.subr.mxu0 0.0
    %125 = vmatpush1.msra.mxu0 0.0
    %126 = vmatprep.subr.mxu0 0.0
    %127 = vmatpush1.msra.mxu0 0.0
    %128 = vmatprep.subr.mxu0 0.0
    %129 = vmatpush1.msra.mxu0 0.0
    %130 = vmatprep.subr.mxu0 0.0
    %131 = vmatpush1.msra.mxu0 0.0
    %132 = vmatprep.subr.mxu0 0.0
    %133 = vmatpush1.msra.mxu0 0.0
    %134 = vmatprep.subr.mxu0 0.0
    %135 = vmatpush1.msra.mxu0 0.0
    %136 = vmatprep.subr.mxu0 0.0
    %137 = vmatpush1.msra.mxu0 0.0
    %138 = vmatprep.subr.mxu0 0.0
    %139 = vmatpush1.msra.mxu0 0.0
    %140 = vmatprep.mubr.f32.mxu0 0.0
    %141 = vmatmul.mubr.f32.gmra.mrb[0].mxu0 %v74
    %v142 = vpop.f32.mrb[0].mxu0
    %v143 = vadd.f32 %v70, %v142
    %v144 = vpop.f32.mrb[0].mxu0
    %145 = vdwg.mxu0
    %v146 = vmax.f32 %v143, 0.0
    %v147 = vld [vmem:[#allocation7] sm:$0xff]
    %v148 = vld [vmem:[#allocation7 + $0x8] sm:$0xff]
    %v149 = vld [vmem:[#allocation7 + $0x10] sm:$0xff]
    %v150 = vld [vmem:[#allocation7 + $0x18] sm:$0xff]
    %v151 = vld [vmem:[#allocation7 + $0x20] sm:$0xff]
    %v152 = vld [vmem:[#allocation7 + $0x28] sm:$0xff]
    %v153 = vld [vmem:[#allocation7 + $0x30] sm:$0xff]
    %v154 = vld [vmem:[#allocation7 + $0x38] sm:$0xff]
    %v155 = vld [vmem:[%s4] sm:$0x1]
    %v157 = vlaneseq
    %v158 = vshrl.u32 %v157, 7
    %v159 = vsub.s32 0, %v158
    %v160 = vrot.slane %v155, %v159
    %vm162 = vcmask 523264
    %v164 = vsel %vm162, %v146, 0
    %166 = vmatprep.subr.mxu0 0.0
    %167 = vmatpush1.msra.mxu0 %v147
    %168 = vmatprep.subr.mxu0 0.0
    %169 = vmatpush1.msra.mxu0 %v148
    %170 = vmatprep.subr.mxu0 0.0
    %171 = vmatpush1.msra.mxu0 %v149
    %172 = vmatprep.subr.mxu0 0.0
    %173 = vmatpush1.msra.mxu0 %v150
    %174 = vmatprep.subr.mxu0 0.0
    %175 = vmatpush1.msra.mxu0 %v151
    %176 = vmatprep.subr.mxu0 0.0
    %177 = vmatpush1.msra.mxu0 %v152
    %178 = vmatprep.subr.mxu0 0.0
    %179 = vmatpush1.msra.mxu0 %v153
    %180 = vmatprep.subr.mxu0 0.0
    %181 = vmatpush1.msra.mxu0 %v154
    %182 = vmatprep.subr.mxu0 0.0
    %183 = vmatpush1.msra.mxu0 0.0
    %184 = vmatprep.subr.mxu0 0.0
    %185 = vmatpush1.msra.mxu0 0.0
    %186 = vmatprep.subr.mxu0 0.0
    %187 = vmatpush1.msra.mxu0 0.0
    %188 = vmatprep.subr.mxu0 0.0
    %189 = vmatpush1.msra.mxu0 0.0
    %190 = vmatprep.subr.mxu0 0.0
    %191 = vmatpush1.msra.mxu0 0.0
    %192 = vmatprep.subr.mxu0 0.0
    %193 = vmatpush1.msra.mxu0 0.0
    %194 = vmatprep.subr.mxu0 0.0
    %195 = vmatpush1.msra.mxu0 0.0
    %196 = vmatprep.subr.mxu0 0.0
    %197 = vmatpush1.msra.mxu0 0.0
    %198 = vmatprep.subr.mxu0 0.0
    %199 = vmatpush1.msra.mxu0 0.0
    %200 = vmatprep.subr.mxu0 0.0
    %201 = vmatpush1.msra.mxu0 0.0
    %202 = vmatprep.subr.mxu0 0.0
    %203 = vmatpush1.msra.mxu0 0.0
    %204 = vmatprep.subr.mxu0 0.0
    %205 = vmatpush1.msra.mxu0 0.0
    %206 = vmatprep.subr.mxu0 0.0
    %207 = vmatpush1.msra.mxu0 0.0
    %208 = vmatprep.subr.mxu0 0.0
    %209 = vmatpush1.msra.mxu0 0.0
    %210 = vmatprep.subr.mxu0 0.0
    %211 = vmatpush1.msra.mxu0 0.0
    %212 = vmatprep.subr.mxu0 0.0
    %213 = vmatpush1.msra.mxu0 0.0
    %214 = vmatprep.subr.mxu0 0.0
    %215 = vmatpush1.msra.mxu0 0.0
    %216 = vmatprep.subr.mxu0 0.0
    %217 = vmatpush1.msra.mxu0 0.0
    %218 = vmatprep.subr.mxu0 0.0
    %219 = vmatpush1.msra.mxu0 0.0
    %220 = vmatprep.subr.mxu0 0.0
    %221 = vmatpush1.msra.mxu0 0.0
    %222 = vmatprep.subr.mxu0 0.0
    %223 = vmatpush1.msra.mxu0 0.0
    %224 = vmatprep.subr.mxu0 0.0
    %225 = vmatpush1.msra.mxu0 0.0
    %226 = vmatprep.subr.mxu0 0.0
    %227 = vmatpush1.msra.mxu0 0.0
    %228 = vmatprep.subr.mxu0 0.0
    %229 = vmatpush1.msra.mxu0 0.0
    %230 = vmatprep.mubr.f32.mxu0 0.0
    %231 = vmatmul.mubr.f32.gmra.mrb[0].mxu0 %v164
    %v232 = vpop.f32.mrb[0].mxu0
    %v233 = vadd.f32 %v160, %v232
    %v234 = vpop.f32.mrb[0].mxu0
    %235 = vdwg.mxu0
    %v236 = vlaneseq
    %v237 = vand.u32 %v236, 127
    %vm238 = vcmp.lt.s32.totalorder %v237, 32
    %vm239 = vcmp.ge.s32.totalorder %v237, 32
    %vm240 = vcmp.lt.s32.totalorder %v237, 64
    %vm241 = vmand %vm239, %vm240
    %vm242 = vcmp.ge.s32.totalorder %v237, 64
    %vm243 = vcmp.lt.s32.totalorder %v237, 96
    %vm244 = vmand %vm242, %vm243
    %vm245 = vcmp.ge.s32.totalorder %v237, 96
    %v246 = vsel %vm245, %v233, -inf
    %247 = vmax.xlane.f32.xlu0 %v246
    %v248 = vpop.xlane.xlu0 %247
    %v249 = vmul.f32 %v233, 2.0
    %v250 = vmin.f32 %v249, 20.0
    %v251 = vsub.f32 0.0, %v233
    %v252 = vsub.f32 %v233, %v248
    %v253 = vsel %vm245, %v252, 0.0
    %v254 = vsel %vm244, %v251, %v253
    %v255 = vsel %vm241, %v250, %v254
    %v256 = vmul.f32 %v255, 1.442695
    %v257 = vpow.pop %v256
    %vm258 = vcmp.gt.f32.partialorder %v249, 20.0
    %v259 = vadd.f32 %v257, 1.0
    %v260 = vlog2.pop %v259
    %v261 = vmul.f32 %v260, 0.6931472
    %v262 = vmul.f32 -0.5, %v257
    %v263 = vadd.f32 %v262, 1.0
    %v264 = vmul.f32 %v263, %v257
    %v265 = vand.u32 2147483647, %v257
    %vm266 = vcmp.lt.f32.partialorder %v265, 0.0004427343
    %v267 = vsel %vm266, %v264, %v261
    %v268 = vmul.f32 %v267, 0.5
    %v269 = vsel %vm258, %v233, %v268
    %v270 = vadd.f32 %v269, 1e-05
    %v271 = vadd.f32 %v257, 1.0
    %v272 = vrcp.pop %v271
    %v273 = vmul.f32 %v272, 0.99999
    %v274 = vadd.f32 %v273, 1e-05
    %v275 = vsel %vm245, %v257, 0.0
    %276 = vadd.xlane.f32.xlu0 %v275
    %v277 = vpop.xlane.xlu0 %276
    %v278 = vrcp.pop %v277
    %v279 = vmul.f32 1.0, %v278
    %v280 = vmul.f32 %v257, %v279
    %v281 = vmul.f32 %v280, 0.99999
    %v282 = vadd.f32 %v281, 1e-05
    %v283 = vsel %vm244, %v274, %v282
    %v284 = vsel %vm241, %v270, %v283
    %v285 = vsel %vm238, %v233, %v284
    %286 = vst [vmem:[#allocation8] sm:$0xff] %v285
    // Predicated region
    $region34: #{tpu_custom_call.1} parent=1 // pred_check
      _
    $region35: #{tpu_custom_call.1} parent=1 // pred_check_branch
      %288 = sbr.rel (0) target = $region37
    $region36: #{tpu_custom_call.1} parent=1 // pred_region
      %s290 = ssub.s32 128, 128
      %291 = vsyncadd [#allocation4], %s290
      %s293 = sshll.u32 [#allocation8], 4
      %s294 = int_to_ptr.vmem [resolvable:$true] %s293
      %296 = dma.vmem_to_hbm [thread:$0]  %s294, 128, %s5, [#allocation4]
    $region37: #{tpu_custom_call.1} parent=1 // pred_fallthru
      _
    // Predicated region
    $region38: #{tpu_custom_call.1} parent=1 // pred_check
      _
    $region39: #{tpu_custom_call.1} parent=1 // pred_check_branch
      %298 = sbr.rel (0) target = $region41
    $region40: #{tpu_custom_call.1} parent=1 // pred_region
      %299 = dma.done [#allocation4], 128
    $region41: #{tpu_custom_call.1} parent=1 // pred_fallthru
      _
    %300 = vsyncpa [#allocation3], 1
    %301 = vsyncpa [#allocation6], 1
    %302 = vsyncpa [#allocation4], 1

</llo_original>
